<compile_context>
chip_gen: v6e
topology: v6e:2x2x1
jax: 0.10.0
libtpu: 0.0.40
codegen_flags: <defaults>
</compile_context>

<pallas_src>
import functools
import math

import jax
import jax.numpy as jnp
from jax import lax
from jax.experimental import pallas as pl
from jax.experimental.pallas import tpu as pltpu


def _round_up(x, m):
    return (x + m - 1) // m * m


def _vmem_capacity_bytes():
    """Physical per-core VMEM (64 MiB v7x, 128 MiB v5e/v6e); safe fallback."""
    try:
        info = pltpu.get_tpu_info()
        cap = getattr(info, "vmem_capacity_bytes", None)
        if cap:
            return int(cap)
    except Exception:
        pass
    return 64 * 1024 * 1024  # conservative: v7x per-TensorCore VMEM


def _pick_tile(n_flat, rows_per_store, tile_rows):
    """Pick (tq, n_pad): tq is a multiple of rows_per_store, preferring a
    divisor of n_flat so the output needs no padding (no trailing slice copy)."""
    cap = max(rows_per_store, (tile_rows // rows_per_store) * rows_per_store)
    best = 0
    t = rows_per_store
    while t <= min(cap, n_flat):
        if n_flat % t == 0:
            best = t
        t += rows_per_store
    if best:
        return best, n_flat
    tq = min(cap, _round_up(n_flat, rows_per_store))
    return tq, _round_up(n_flat, tq)


# --------------------------------------------------------------------------
# Kernel 1: LUT resident in VMEM (constant-index BlockSpec), in-register
# gather of rows_per_store rows -> one dense unmasked store per chunk.
# --------------------------------------------------------------------------
def _embed_resident_kernel(ids_ref, lut_ref, out_ref, *,
                           tq, rows_per_store, scale, ids_global):
    tile_base = pl.program_id(0) * tq if ids_global else 0
    n_chunks = tq // rows_per_store

    def chunk_body(c, carry):
        base = pl.multiple_of(c * rows_per_store, rows_per_store)
        # Masked single-row loads ride the 3-wide vld slots; assembling the
        # rows in registers lets the store be a dense, unmasked block store.
        rows = [lut_ref[pl.ds(ids_ref[tile_base + base + r], 1), :]
                for r in range(rows_per_store)]
        block = jnp.concatenate(rows, axis=0)
        out_ref[pl.ds(base, rows_per_store), :] = (block * scale).astype(out_ref.dtype)
        return carry

    lax.fori_loop(0, n_chunks, chunk_body, 0, unroll=min(8, n_chunks))


# --------------------------------------------------------------------------
# Kernel 2: LUT stays in HBM; per-row DMA gather with a ring of in-flight
# copies into a VMEM scratch tile, then one dense scaled store.
# --------------------------------------------------------------------------
def _embed_hbm_gather_kernel(ids_ref, lut_hbm_ref, out_ref, gather_buf, copy_sems,
                             *, tq, scale, n_inflight, ids_global):
    tile_base = pl.program_id(0) * tq if ids_global else 0

    def row_copy(r, slot):
        tok = ids_ref[tile_base + r]
        return pltpu.make_async_copy(
            lut_hbm_ref.at[pl.ds(tok, 1), :],
            gather_buf.at[pl.ds(r, 1), :],
            copy_sems.at[slot],
        )

    def issue_body(r, carry):
        slot = lax.rem(r, n_inflight)

        @pl.when(r >= n_inflight)
        def _wait_prev():
            # Free this semaphore slot (same copy size, so the wait matches).
            row_copy(r - n_inflight, slot).wait()

        row_copy(r, slot).start()
        return carry

    lax.fori_loop(0, tq, issue_body, 0)

    def drain_body(r, carry):
        row_copy(r, lax.rem(r, n_inflight)).wait()
        return carry

    lax.fori_loop(max(tq - n_inflight, 0), tq, drain_body, 0)

    out_ref[...] = (gather_buf[...] * scale).astype(out_ref.dtype)


# --------------------------------------------------------------------------
# Wrapper: path selection + specs.
# --------------------------------------------------------------------------
def embeddings_forward(x_ids, lut, *, tile_rows=512, force_path=None):
    """Equivalent of: nn.Embedding(n_token, d_model)(x) * sqrt(d_model)."""
    n_token, d_model = lut.shape
    dtype = lut.dtype
    itemsize = jnp.dtype(dtype).itemsize
    scale = math.sqrt(d_model)

    x_shape = x_ids.shape
    n_flat = math.prod(x_shape)

    # NOTE: nn.Embedding raises on out-of-range ids; we clamp instead so a bad
    # id can never become an out-of-bounds VMEM/HBM access.
    ids_flat = jnp.clip(x_ids.reshape(-1).astype(jnp.int32), 0, n_token - 1)

    # Native sublane packing: 8 rows (f32) / 16 (bf16) / 32 (int8/fp8) per store.
    rows_per_store = max(8, 32 // itemsize)

    vmem_cap = _vmem_capacity_bytes()
    row_bytes = d_model * itemsize
    # Cap the tile so output double-buffer + gather scratch always fit VMEM.
    rows_cap = max(rows_per_store,
                   (int(0.2 * vmem_cap) // max(row_bytes, 1))
                   // rows_per_store * rows_per_store)
    tq, n_pad = _pick_tile(n_flat, rows_per_store, min(tile_rows, rows_cap))
    n_tiles = n_pad // tq

    if n_pad != n_flat:
        ids_flat = jnp.pad(ids_flat, (0, n_pad - n_flat))  # pads with id 0 (valid)

    lut_bytes = n_token * d_model * itemsize
    tile_bytes = tq * row_bytes
    out_bytes = n_flat * row_bytes

    # Resident-LUT budget: the constant-index LUT block is still
    # double-buffered by default, so account for 2x.
    # TODO(synk): single-buffer the LUT (pl.Buffered(1)) and/or shrink tq /
    # split d_model across cores on v7x to raise the residency threshold.
    resident_need = 2 * lut_bytes + 2 * tile_bytes + (1 << 20)
    resident_fits = resident_need <= int(0.85 * vmem_cap)

    if force_path == "resident":
        if not resident_fits:
            raise ValueError("resident path forced but LUT does not fit VMEM budget")
        use_resident = True
    elif force_path == "hbm_gather":
        use_resident = False
    else:
        # Keep the table resident only if it fits AND this call touches at
        # least as many bytes as staging the table costs; otherwise DMA-gather
        # straight from HBM (short sequences / decode).
        use_resident = resident_fits and out_bytes >= lut_bytes

    hbm_need = 3 * tile_bytes + (1 << 20)
    need = resident_need if use_resident else hbm_need
    vmem_limit = int(min(0.9 * vmem_cap, max(32 << 20, need + (4 << 20))))

    n_inflight = min(8, tq)

    # Ids delivery: scalar prefetch (whole array in SMEM) for typical sizes;
    # per-tile blocked SMEM input for very long sequences.
    use_prefetch_ids = n_pad <= 32 * 1024

    compiler_params = pltpu.CompilerParams(
        dimension_semantics=("parallel",),
        vmem_limit_bytes=vmem_limit,
    )
    out_shape = jax.ShapeDtypeStruct((n_pad, d_model), dtype)

    if use_resident:
        kernel = functools.partial(
            _embed_resident_kernel, tq=tq, rows_per_store=rows_per_store,
            scale=scale, ids_global=use_prefetch_ids)
        scratch = []
    else:
        kernel = functools.partial(
            _embed_hbm_gather_kernel, tq=tq, scale=scale,
            n_inflight=n_inflight, ids_global=use_prefetch_ids)
        scratch = [pltpu.VMEM((tq, d_model), dtype),
                   pltpu.SemaphoreType.DMA((n_inflight,))]

    if use_prefetch_ids:
        if use_resident:
            lut_spec = pl.BlockSpec((n_token, d_model), lambda i, ids: (0, 0))
        else:
            lut_spec = pl.BlockSpec(memory_space=pl.ANY)
        grid_spec = pltpu.PrefetchScalarGridSpec(
            num_scalar_prefetch=1,
            grid=(n_tiles,),
            in_specs=[lut_spec],
            out_specs=pl.BlockSpec((tq, d_model), lambda i, ids: (i, 0)),
            scratch_shapes=scratch,
        )
        out_flat = pl.pallas_call(
            kernel, out_shape=out_shape, grid_spec=grid_spec,
            compiler_params=compiler_params,
        )(ids_flat, lut)
    else:
        ids_spec = pl.BlockSpec((tq,), lambda i: (i,),
                                memory_space=pltpu.MemorySpace.SMEM)
        if use_resident:
            lut_spec = pl.BlockSpec((n_token, d_model), lambda i: (0, 0))
        else:
            lut_spec = pl.BlockSpec(memory_space=pl.ANY)
        out_flat = pl.pallas_call(
            kernel, out_shape=out_shape,
            grid=(n_tiles,),
            in_specs=[ids_spec, lut_spec],
            out_specs=pl.BlockSpec((tq, d_model), lambda i: (i, 0)),
            scratch_shapes=scratch,
            compiler_params=compiler_params,
        )(ids_flat, lut)

    if n_pad != n_flat:
        # TODO(synk): handle the ragged tail in-kernel to avoid this slice copy.
        out_flat = out_flat[:n_flat]
    return out_flat.reshape(*x_shape, d_model)


if __name__ == "__main__":
    # Small, deterministic config (mirrors Embeddings(n_token, d_model)).
    n_token = 64
    d_model = 128
    B, S = 2, 8

    key = jax.random.PRNGKey(0)
    k_lut, k_ids = jax.random.split(key)

    # nn.Embedding default init: N(0, 1)
    lut = jax.random.normal(k_lut, (n_token, d_model), dtype=jnp.float32)
    x_ids = jax.random.randint(k_ids, (B, S), 0, n_token, dtype=jnp.int32)

    ref = lut[x_ids] * math.sqrt(d_model)

    out_auto = jax.block_until_ready(embeddings_forward(x_ids, lut))
    out_res = jax.block_until_ready(embeddings_forward(x_ids, lut, force_path="resident"))
    out_hbm = jax.block_until_ready(embeddings_forward(x_ids, lut, force_path="hbm_gather"))

    for name, out in (("auto", out_auto), ("resident", out_res), ("hbm_gather", out_hbm)):
        assert out.shape == (B, S, d_model), (name, out.shape)
        assert jnp.allclose(out, ref, atol=1e-6, rtol=1e-6), f"mismatch vs reference ({name})"

    print("KERNEL_OK")
</pallas_src>

<mosaic_0001>
module attributes {stable_mosaic.version = 11 : i64} {
  func.func @_embed_hbm_gather_kernel(%arg0: i32, %arg1: memref<16xi32, #tpu.memory_space<smem>>, %arg2: memref<64x128xf32, #tpu.memory_space<any>>, %arg3: memref<16x128xf32, #tpu.memory_space<vmem>>, %arg4: memref<16x128xf32, #tpu.memory_space<vmem>>, %arg5: memref<8x!tpu.dma_semaphore, #tpu.memory_space<semaphore_mem>>) attributes {dimension_semantics = [#tpu.dimension_semantics<parallel>], iteration_bounds = array<i64: 1>, scalar_prefetch = 1 : i64, scratch_operands = 2 : i64, tpu.core_type = #tpu.core_type<tc>, window_params = [{}, {transform_indices = @transform_1, window_bounds = array<i64: 16, 128>}]} {
    %c16_i32 = arith.constant 16 : i32
    %0 = arith.muli %arg0, %c16_i32 : i32
    %c0_i32 = arith.constant 0 : i32
    %c16_i32_0 = arith.constant 16 : i32
    %1 = arith.addi %c0_i32, %c16_i32_0 : i32
    %c1_i32 = arith.constant 1 : i32
    scf.for %arg6 = %c0_i32 to %1 step %c1_i32  : i32 {
      %c8_i32_8 = arith.constant 8 : i32
      %7 = arith.remsi %arg6, %c8_i32_8 : i32
      %c8_i32_9 = arith.constant 8 : i32
      %8 = arith.cmpi sge, %arg6, %c8_i32_9 : i32
      %9 = arith.extui %8 : i1 to i32
      %c0_i32_10 = arith.constant 0 : i32
      %10 = arith.cmpi ne, %9, %c0_i32_10 : i32
      scf.if %10 {
        %c8_i32_13 = arith.constant 8 : i32
        %18 = arith.subi %arg6, %c8_i32_13 : i32
        %19 = arith.addi %0, %18 : i32
        %20 = arith.index_cast %19 : i32 to index
        %21 = memref.load %arg1[%20] : memref<16xi32, #tpu.memory_space<smem>>
        %c0_i32_14 = arith.constant 0 : i32
        %22 = tpu.memref_slice %arg2[%21, %c0_i32_14] : memref<64x128xf32, #tpu.memory_space<any>> -> memref<1x128xf32, #tpu.memory_space<any>>
        %c0_i32_15 = arith.constant 0 : i32
        %23 = tpu.memref_slice %arg4[%18, %c0_i32_15] : memref<16x128xf32, #tpu.memory_space<vmem>> -> memref<1x128xf32, #tpu.memory_space<vmem>>
        %24 = tpu.memref_slice %arg5[%7] : memref<8x!tpu.dma_semaphore, #tpu.memory_space<semaphore_mem>> -> memref<1x!tpu.dma_semaphore, #tpu.memory_space<semaphore_mem>>
        %25 = tpu.memref_squeeze %24 : memref<1x!tpu.dma_semaphore, #tpu.memory_space<semaphore_mem>> -> memref<!tpu.dma_semaphore, #tpu.memory_space<semaphore_mem>>
        tpu.wait_dma2 semaphore(%25 : memref<!tpu.dma_semaphore, #tpu.memory_space<semaphore_mem>>) src(%22 : memref<1x128xf32, #tpu.memory_space<any>>) dst(%23 : memref<1x128xf32, #tpu.memory_space<vmem>>)
      } else {
      }
      %11 = arith.addi %0, %arg6 : i32
      %12 = arith.index_cast %11 : i32 to index
      %13 = memref.load %arg1[%12] : memref<16xi32, #tpu.memory_space<smem>>
      %c0_i32_11 = arith.constant 0 : i32
      %14 = tpu.memref_slice %arg2[%13, %c0_i32_11] : memref<64x128xf32, #tpu.memory_space<any>> -> memref<1x128xf32, #tpu.memory_space<any>>
      %c0_i32_12 = arith.constant 0 : i32
      %15 = tpu.memref_slice %arg4[%arg6, %c0_i32_12] : memref<16x128xf32, #tpu.memory_space<vmem>> -> memref<1x128xf32, #tpu.memory_space<vmem>>
      %16 = tpu.memref_slice %arg5[%7] : memref<8x!tpu.dma_semaphore, #tpu.memory_space<semaphore_mem>> -> memref<1x!tpu.dma_semaphore, #tpu.memory_space<semaphore_mem>>
      %17 = tpu.memref_squeeze %16 : memref<1x!tpu.dma_semaphore, #tpu.memory_space<semaphore_mem>> -> memref<!tpu.dma_semaphore, #tpu.memory_space<semaphore_mem>>
      tpu.enqueue_dma source(%14 : memref<1x128xf32, #tpu.memory_space<any>>) target(%15 : memref<1x128xf32, #tpu.memory_space<vmem>>) target_semaphore(%17 : memref<!tpu.dma_semaphore, #tpu.memory_space<semaphore_mem>>)
    }
    %c16_i32_1 = arith.constant 16 : i32
    %c8_i32 = arith.constant 8 : i32
    %c8_i32_2 = arith.constant 8 : i32
    %2 = arith.addi %c8_i32, %c8_i32_2 : i32
    %c1_i32_3 = arith.constant 1 : i32
    scf.for %arg6 = %c8_i32 to %2 step %c1_i32_3  : i32 {
      %c8_i32_8 = arith.constant 8 : i32
      %7 = arith.remsi %arg6, %c8_i32_8 : i32
      %8 = arith.addi %0, %arg6 : i32
      %9 = arith.index_cast %8 : i32 to index
      %10 = memref.load %arg1[%9] : memref<16xi32, #tpu.memory_space<smem>>
      %c0_i32_9 = arith.constant 0 : i32
      %11 = tpu.memref_slice %arg2[%10, %c0_i32_9] : memref<64x128xf32, #tpu.memory_space<any>> -> memref<1x128xf32, #tpu.memory_space<any>>
      %c0_i32_10 = arith.constant 0 : i32
      %12 = tpu.memref_slice %arg4[%arg6, %c0_i32_10] : memref<16x128xf32, #tpu.memory_space<vmem>> -> memref<1x128xf32, #tpu.memory_space<vmem>>
      %13 = tpu.memref_slice %arg5[%7] : memref<8x!tpu.dma_semaphore, #tpu.memory_space<semaphore_mem>> -> memref<1x!tpu.dma_semaphore, #tpu.memory_space<semaphore_mem>>
      %14 = tpu.memref_squeeze %13 : memref<1x!tpu.dma_semaphore, #tpu.memory_space<semaphore_mem>> -> memref<!tpu.dma_semaphore, #tpu.memory_space<semaphore_mem>>
      tpu.wait_dma2 semaphore(%14 : memref<!tpu.dma_semaphore, #tpu.memory_space<semaphore_mem>>) src(%11 : memref<1x128xf32, #tpu.memory_space<any>>) dst(%12 : memref<1x128xf32, #tpu.memory_space<vmem>>)
    }
    %c8_i32_4 = arith.constant 8 : i32
    %c0 = arith.constant 0 : index
    %c0_5 = arith.constant 0 : index
    %3 = vector.load %arg4[%c0, %c0_5] : memref<16x128xf32, #tpu.memory_space<vmem>>, vector<16x128xf32>
    %cst = arith.constant 11.3137083 : f32
    %4 = vector.broadcast %cst : f32 to vector<16x128xf32>
    %5 = arith.mulf %3, %4 : vector<16x128xf32>
    %c0_6 = arith.constant 0 : index
    %c0_7 = arith.constant 0 : index
    %6 = vector.load %arg3[%c0_6, %c0_7] : memref<16x128xf32, #tpu.memory_space<vmem>>, vector<16x128xf32>
    tpu.vector_store %arg3[%c0_6, %c0_7], %5 {strides = array<i32>} : memref<16x128xf32, #tpu.memory_space<vmem>>, vector<16x128xf32>,
    return
  }
  func.func @transform_1(%arg0: i32, %arg1: memref<16xi32, #tpu.memory_space<smem>>) -> (i32, i32) {
    %c0_i32 = arith.constant 0 : i32
    %c0_i32_0 = arith.constant 0 : i32
    return %arg0, %c0_i32 : i32, i32
  }
}

</mosaic_0001>

<llo_original>
// kernel: tpu_custom_call.1
$region0: #{tpu_custom_call.1}
  #allocation0 [shape = 'u32[]', space=smem, size = 0x4, offset = 0x4, fixed_abs, tag = 'smem constant byte address 0x4 - core index']
  #allocation1 [shape = 'u32[144,128]{1,0:T(1,128)}', space=vmem, size = 0x12000, scoped, tag = 'internal scratch']
  #allocation2 [shape = 'f32[16,128]{1,0:T(8,128)}', space=vmem, size = 0x2000, scoped, tag = 'scratch operand']
  #allocation3 [shape = 's32[8]{0}', space=sflag, size = 0x20, scoped, tag = 'scratch operand']
  #allocation4 [shape = 's32[1]{0}', space=sflag, size = 0x4, scoped, tag = 'scoped memory for tpu_custom_call.1']
  #allocation5 [shape = 'u8[512]{0}', space=smem, size = 0x200, scoped, tag = 'prefetched SMEM operand 0']
  #allocation8 [shape = 's32[]', space=sflag, size = 0x4, offset = 0, fixed_abs, tag = 'sflag constant byte address 0x0 - dummy sync flag']
  #allocation9 [shape = 's32[]', space=sflag, size = 0x4, offset = 0, fixed_abs, tag = 'sflag constant byte address 0x0 - dummy sync flag']
  #allocation10 [shape = 'u32[]', space=smem, size = 0x4, offset = 0x44, fixed_abs, tag = 'smem constant byte address 0x44 - assertion arg 0']
  #allocation11 [shape = 'u32[]', space=smem, size = 0x4, offset = 0x48, fixed_abs, tag = 'smem constant byte address 0x48 - assertion arg 1']
  %s0 = inlined_call_operand.hbm [shape: s32[16], index: 0, kind: input, shape index: {}]
  %s1 = inlined_call_operand.hbm [shape: f32[64,128], index: 1, kind: input, shape index: {}]
  %s2 = inlined_call_operand.hbm [shape: f32[16,128], index: 2, kind: output, shape index: {}]
  %s3 = sld [smem:[#allocation0]]
  $region32: #{tpu_custom_call.1} parent=0
    _
  %s5 = ssub.s32 1, %s3
  %s6 = scalar_select 0, %s5, %s3
  %8 = dma.hbm_to_smem %s0, 16, [#allocation5], [#allocation4]
  %9 = dma.done [#allocation4], 16
  %10 = sfence
  $region1: #{tpu_custom_call.1} parent=0
    #allocation6 [shape = 'u8[8192]{0}', space=vmem, size = 0x2000, scoped, tag = 'output window, operand 0, single buffered']
    #allocation7 [shape = 's32[1]{0}', space=sflag, size = 0x4, scoped, tag = 'scoped memory for tpu_custom_call.1']
    %11 = vsyncpa [#allocation7], 0
    %s12 = smul.u32 0, 16
    loop: start=0, step=1, limit=16
    $region2: #{tpu_custom_call.1} parent=1 // loop_pre_header
      _
    $region3: #{tpu_custom_call.1} parent=1 // loop_header
      %s14 = sphi 0, %s18
      %p15 = scmp.ge.s32.totalorder %s14, 16
    $region4: #{tpu_custom_call.1} parent=1 // loop_header_branch
      %17 = sbr.rel (%p15) target = $region8
    $region5: #{tpu_custom_call.1} parent=1 // loop_body
      %p19 = scmp.lt.s32.totalorder %s14, 0
      %s20 = ssub.s32 0, %s14
      %s21 = scalar_select %p19, %s20, %s14
      %s22 = sand.u32 %s21, 7
      %s23 = ssub.s32 0, %s22
      %s24 = scalar_select %p19, %s23, %s22
      %p25 = scmp.ge.s32.totalorder %s14, 8
      // Predicated region
      $region9: #{tpu_custom_call.1} parent=5 // pred_check
        %p26 = pneg %p25
      $region10: #{tpu_custom_call.1} parent=5 // pred_check_branch
        %28 = sbr.rel (%p26) target = $region12
      $region11: #{tpu_custom_call.1} parent=5 // pred_region
        %s29 = ssub.s32 %s14, 8
        %s30 = sadd.s32 %s12, %s29
        %s31 = sld [smem:[#allocation5 + %s30]]
        %s32 = scalar_lea.sflag [#allocation3], %s24
        %s33 = smul.u32 1, 1
        %s34 = sshll.u32 %s33, 4
        %35 = dma.done %s32, %s34
      $region12: #{tpu_custom_call.1} parent=5 // pred_fallthru
        _
      %s36 = sadd.s32 %s12, %s14
      %s37 = sld [smem:[#allocation5 + %s36]]
      %s38 = smul.addr %s37, 16
      %s39 = scalar_lea.hbm %s1, %s38
      %s40 = scalar_lea.vmem [#allocation2], %s14
      %s41 = scalar_lea.sflag [#allocation3], %s24
      // Predicated region
      $region13: #{tpu_custom_call.1} parent=5 // pred_check
        _
      $region14: #{tpu_custom_call.1} parent=5 // pred_check_branch
        %43 = sbr.rel target = $region16
      $region15: #{tpu_custom_call.1} parent=5 // pred_region
        %44 = sst [smem:[#allocation10]] [#allocation9]
        %45 = sst [smem:[#allocation11]] [#allocation8]
      $region16: #{tpu_custom_call.1} parent=5 // pred_fallthru
        _
      %47 = shalt.err (0)
      %s49 = sshll.u32 %s40, 4
      %s50 = int_to_ptr.vmem [resolvable:$true] %s49
      %52 = dma.hbm_to_vmem [thread:$0]  %s39, 16, %s50, %s41
    $region6: #{tpu_custom_call.1} parent=1 // loop_footer
      %s18 = sadd.s32 1, %s14
    $region7: #{tpu_custom_call.1} parent=1 // loop_footer_branch
      %13 = sbr.rel target = $region3
    $region8: #{tpu_custom_call.1} parent=1 // loop_exit
      _
    loop: start=8, step=1, limit=16
    $region17: #{tpu_custom_call.1} parent=1 // loop_pre_header
      _
    $region18: #{tpu_custom_call.1} parent=1 // loop_header
      %s54 = sphi 8, %s58
      %p55 = scmp.ge.s32.totalorder %s54, 16
    $region19: #{tpu_custom_call.1} parent=1 // loop_header_branch
      %57 = sbr.rel (%p55) target = $region23
    $region20: #{tpu_custom_call.1} parent=1 // loop_body
      %p59 = scmp.lt.s32.totalorder %s54, 0
      %s60 = ssub.s32 0, %s54
      %s61 = scalar_select %p59, %s60, %s54
      %s62 = sand.u32 %s61, 7
      %s63 = ssub.s32 0, %s62
      %s64 = scalar_select %p59, %s63, %s62
      %s65 = sadd.s32 %s12, %s54
      %s66 = sld [smem:[#allocation5 + %s65]]
      %s67 = scalar_lea.sflag [#allocation3], %s64
      %s68 = smul.u32 1, 1
      %s69 = sshll.u32 %s68, 4
      %70 = dma.done %s67, %s69
    $region21: #{tpu_custom_call.1} parent=1 // loop_footer
      %s58 = sadd.s32 1, %s54
    $region22: #{tpu_custom_call.1} parent=1 // loop_footer_branch
      %53 = sbr.rel target = $region18
    $region23: #{tpu_custom_call.1} parent=1 // loop_exit
      _
    %v71 = vld [vmem:[#allocation2] sm:$0xff]
    %v72 = vld [vmem:[#allocation2 + $0x8] sm:$0xff]
    %v73 = vmul.f32 %v71, 11.313708
    %v74 = vmul.f32 %v72, 11.313708
    %75 = vst [vmem:[#allocation6] sm:$0xff] %v73
    %76 = vst [vmem:[#allocation6 + $0x8] sm:$0xff] %v74
    // Predicated region
    $region24: #{tpu_custom_call.1} parent=1 // pred_check
      _
    $region25: #{tpu_custom_call.1} parent=1 // pred_check_branch
      %78 = sbr.rel (0) target = $region27
    $region26: #{tpu_custom_call.1} parent=1 // pred_region
      %s80 = ssub.s32 256, 256
      %81 = vsyncadd [#allocation7], %s80
      %s82 = sshll.u32 [#allocation6], 4
      %s83 = int_to_ptr.vmem [resolvable:$true] %s82
      %88 = dma.vmem_to_hbm [thread:$0]  %s83, 256, %s2, [#allocation7], 128, 128, 8
    $region27: #{tpu_custom_call.1} parent=1 // pred_fallthru
      _
    // Predicated region
    $region28: #{tpu_custom_call.1} parent=1 // pred_check
      _
    $region29: #{tpu_custom_call.1} parent=1 // pred_check_branch
      %90 = sbr.rel (0) target = $region31
    $region30: #{tpu_custom_call.1} parent=1 // pred_region
      %91 = dma.done [#allocation7], 256
    $region31: #{tpu_custom_call.1} parent=1 // pred_fallthru
      _
    %92 = vsyncpa [#allocation7], 1
  %93 = vsyncmov [#allocation3]
  %s94 = vpop.sfrf %93
  %p95 = scmp.eq.s32.totalorder %s94, 0
  %p96 = pneg %p95
  %98 = shalt.err (%p96)
  %s99 = scalar_lea.sflag [#allocation3], 1
  %100 = vsyncmov %s99
  %s101 = vpop.sfrf %100
  %p102 = scmp.eq.s32.totalorder %s101, 0
  %p103 = pneg %p102
  %105 = shalt.err (%p103)
  %s106 = scalar_lea.sflag [#allocation3], 2
  %107 = vsyncmov %s106
  %s108 = vpop.sfrf %107
  %p109 = scmp.eq.s32.totalorder %s108, 0
  %p110 = pneg %p109
  %112 = shalt.err (%p110)
  %s113 = scalar_lea.sflag [#allocation3], 3
  %114 = vsyncmov %s113
  %s115 = vpop.sfrf %114
  %p116 = scmp.eq.s32.totalorder %s115, 0
  %p117 = pneg %p116
  %119 = shalt.err (%p117)
  %s120 = scalar_lea.sflag [#allocation3], 4
  %121 = vsyncmov %s120
  %s122 = vpop.sfrf %121
  %p123 = scmp.eq.s32.totalorder %s122, 0
  %p124 = pneg %p123
  %126 = shalt.err (%p124)
  %s127 = scalar_lea.sflag [#allocation3], 5
  %128 = vsyncmov %s127
  %s129 = vpop.sfrf %128
  %p130 = scmp.eq.s32.totalorder %s129, 0
  %p131 = pneg %p130
  %133 = shalt.err (%p131)
  %s134 = scalar_lea.sflag [#allocation3], 6
  %135 = vsyncmov %s134
  %s136 = vpop.sfrf %135
  %p137 = scmp.eq.s32.totalorder %s136, 0
  %p138 = pneg %p137
  %140 = shalt.err (%p138)
  %s141 = scalar_lea.sflag [#allocation3], 7
  %142 = vsyncmov %s141
  %s143 = vpop.sfrf %142
  %p144 = scmp.eq.s32.totalorder %s143, 0
  %p145 = pneg %p144
  %147 = shalt.err (%p145)

</llo_original>
